<compile_context>
chip_gen: v5e
topology: v5e:2x2
jax: 0.10.0
libtpu: 0.0.40
codegen_flags: <defaults>
</compile_context>

<pallas_src>
import functools
import math

import jax
import jax.numpy as jnp
from jax import lax
from jax.experimental import pallas as pl
from jax.experimental.pallas import tpu as pltpu


def _mha_kernel(x_ref, wqkv_ref, bqkv_ref, wo_ref, bo_ref, o_ref, *,
                n_heads, batch_block, seq_len):
    BB, S = batch_block, seq_len
    D = x_ref.shape[-1]
    H = n_heads
    dh = D // H

    # ---- fused QKV in-projection over the whole (BB*S, D) slab ------------
    xf = x_ref[...].astype(jnp.bfloat16)                        # (BB*S, D)
    qkv = jnp.dot(xf, wqkv_ref[...],
                  preferred_element_type=jnp.float32) + bqkv_ref[...]
    # Q columns already carry the 1/sqrt(dh) scale (folded at prep time).
    qkv16 = qkv.astype(jnp.bfloat16).reshape(BB, S, 3 * D)      # leading split

    # ---- additive tril mask generated in-kernel (PyTorch float-mask
    #      semantics: +1.0 on/below diagonal, +0.0 above — NOT -inf masking).
    rows = lax.broadcasted_iota(jnp.int32, (S, S), 0)
    cols = lax.broadcasted_iota(jnp.int32, (S, S), 1)
    add_mask = jnp.where(rows >= cols, 1.0, 0.0).astype(jnp.float32)

    dn_scores = (((2,), (2,)), ((0,), (0,)))  # (BB,S,dh)x(BB,S,dh)->(BB,S,S)
    dn_ctx = (((2,), (1,)), ((0,), (0,)))     # (BB,S,S)x(BB,S,dh)->(BB,S,dh)

    out = None
    for h in range(H):      # unrolled: H is small & static; no stack/concat
        qh = qkv16[:, :, h * dh:(h + 1) * dh]
        kh = qkv16[:, :, D + h * dh:D + (h + 1) * dh]
        vh = qkv16[:, :, 2 * D + h * dh:2 * D + (h + 1) * dh]

        # scores + softmax (f32 VPU/EUP math)
        s = lax.dot_general(qh, kh, dn_scores,
                            preferred_element_type=jnp.float32)  # (BB,S,S)
        s = s + add_mask                                         # additive mask
        s = s - jnp.max(s, axis=-1, keepdims=True)
        p = jnp.exp(s)
        p = p * pl.reciprocal(jnp.sum(p, axis=-1, keepdims=True), approx=True)

        # context + per-head out-projection accumulate (no head concat)
        ctx = lax.dot_general(p.astype(jnp.bfloat16), vh, dn_ctx,
                              preferred_element_type=jnp.float32)  # (BB,S,dh)
        part = jnp.dot(ctx.reshape(BB * S, dh).astype(jnp.bfloat16),
                       wo_ref[h],
                       preferred_element_type=jnp.float32)         # (BB*S,D)
        out = part if out is None else out + part

    o_ref[...] = (out + bo_ref[...]).astype(o_ref.dtype)


def prepare_mha_params(in_proj_weight, in_proj_bias,
                       out_proj_weight, out_proj_bias, *, n_heads):
    """One-time weight-layout transform: transpose for `x @ W`, fold
    1/sqrt(dh) into the Q columns, split the out-projection per head as
    (H, dh, D), cast MXU weight operands to bf16 (biases stay f32)."""
    D = out_proj_weight.shape[0]
    dh = D // n_heads
    scale = 1.0 / math.sqrt(dh)

    wqkv_t = in_proj_weight.T                       # (D, 3D)
    bqkv = in_proj_bias.reshape(1, 3 * D)
    wqkv_t = wqkv_t.at[:, :D].multiply(scale)       # fold query scaling
    bqkv = bqkv.at[:, :D].multiply(scale)

    wo_hsplit = out_proj_weight.T.reshape(n_heads, dh, D)   # (H, dh, D)
    bo = out_proj_bias.reshape(1, D)

    return (wqkv_t.astype(jnp.bfloat16), bqkv.astype(jnp.float32),
            wo_hsplit.astype(jnp.bfloat16), bo.astype(jnp.float32))


# Per-block activation-element threshold below which a 2-way batch split
# (for v7x's two TensorCores) is pure per-step overhead.
_SPLIT_MIN_ELEMS_PER_BLOCK = 1 << 20


def torch_causal_attention(x, wqkv_t, bqkv, wo_hsplit, bo, *, n_heads,
                           key_padding_mask=None):
    """x: (B, S, D).  key_padding_mask is accepted but ignored (the PyTorch
    module never forwards it to mha)."""
    del key_padding_mask
    B, S, D = x.shape
    dh = D // n_heads

    # Split the batch across two grid steps only when each half carries enough
    # work to hide the ~0.35 us per-step setup (v7x dual-TC case).  On v5e/v6e
    # (single TC) the grid is a sequential loop, so small sizes always use 1.
    n_blocks = 2 if (B % 2 == 0 and
                     (B // 2) * S * D >= _SPLIT_MIN_ELEMS_PER_BLOCK) else 1
    BB = B // n_blocks

    kernel = functools.partial(_mha_kernel, n_heads=n_heads,
                               batch_block=BB, seq_len=S)
    out2d = pl.pallas_call(
        kernel,
        out_shape=jax.ShapeDtypeStruct((B * S, D), x.dtype),
        grid_spec=pltpu.PrefetchScalarGridSpec(
            num_scalar_prefetch=0,
            grid=(n_blocks,),
            in_specs=[
                pl.BlockSpec((BB * S, D), lambda b: (b, 0)),
                pl.BlockSpec((D, 3 * D), lambda b: (0, 0)),
                pl.BlockSpec((1, 3 * D), lambda b: (0, 0)),
                pl.BlockSpec((n_heads, dh, D), lambda b: (0, 0, 0)),
                pl.BlockSpec((1, D), lambda b: (0, 0)),
            ],
            out_specs=pl.BlockSpec((BB * S, D), lambda b: (b, 0)),
        ),
        compiler_params=pltpu.CompilerParams(
            dimension_semantics=("parallel",)),
    )(x.reshape(B * S, D), wqkv_t, bqkv, wo_hsplit, bo)
    return out2d.reshape(B, S, D)


def _reference(x, in_proj_weight, in_proj_bias, out_proj_weight,
               out_proj_bias, *, n_heads):
    """Pure-JAX f32 reference mirroring F.multi_head_attention_forward (eval)
    with the module's float tril mask (additive)."""
    B, S, D = x.shape
    dh = D // n_heads
    qkv = x @ in_proj_weight.T + in_proj_bias                # (B, S, 3D)
    q, k, v = qkv[..., :D], qkv[..., D:2 * D], qkv[..., 2 * D:]

    def split(t):  # (B, S, D) -> (B, H, S, dh)
        return t.reshape(B, S, n_heads, dh).transpose(0, 2, 1, 3)

    q, k, v = split(q) / math.sqrt(dh), split(k), split(v)
    mask = jnp.tril(jnp.ones((S, S), jnp.float32))           # additive float mask
    s = jnp.einsum("bhqd,bhkd->bhqk", q, k) + mask
    p = jax.nn.softmax(s, axis=-1)
    ctx = jnp.einsum("bhqk,bhkd->bhqd", p, v)
    ctx = ctx.transpose(0, 2, 1, 3).reshape(B, S, D)
    return ctx @ out_proj_weight.T + out_proj_bias


if __name__ == "__main__":
    # cfg: d_model=32, n_heads=4, max_seq_len=8, attn_pdrop=0.0
    B, S, D, H = 2, 8, 32, 4

    key = jax.random.PRNGKey(0)
    kx, kw1, kw2 = jax.random.split(key, 3)

    x = jax.random.normal(kx, (B, S, D), dtype=jnp.float32)

    # nn.MultiheadAttention params: in_proj_weight (3D, D) xavier-uniform,
    # in_proj_bias zeros, out_proj Linear(D, D) weight + zero bias.
    lim_in = math.sqrt(6.0 / (3 * D + D))
    in_proj_weight = jax.random.uniform(kw1, (3 * D, D), jnp.float32,
                                        -lim_in, lim_in)
    in_proj_bias = jnp.zeros((3 * D,), jnp.float32)
    lim_out = math.sqrt(1.0 / D)
    out_proj_weight = jax.random.uniform(kw2, (D, D), jnp.float32,
                                         -lim_out, lim_out)
    out_proj_bias = jnp.zeros((D,), jnp.float32)

    wqkv_t, bqkv, wo_hsplit, bo = prepare_mha_params(
        in_proj_weight, in_proj_bias, out_proj_weight, out_proj_bias,
        n_heads=H)

    # key_padding_mask exists in the PyTorch signature but is never used.
    key_padding_mask = jnp.zeros((B, S), dtype=jnp.bool_)    # ignored

    out = torch_causal_attention(x, wqkv_t, bqkv, wo_hsplit, bo, n_heads=H,
                                 key_padding_mask=key_padding_mask)
    out = jax.block_until_ready(out)

    ref = _reference(x, in_proj_weight, in_proj_bias, out_proj_weight,
                     out_proj_bias, n_heads=H)
    assert out.shape == (B, S, D)
    # Tolerance accounts for bf16 MXU operands + EUP approx reciprocal in the
    # kernel vs. the pure-f32 reference.
    assert jnp.allclose(out, ref, atol=5e-2, rtol=5e-2), "mismatch vs reference"

    print("KERNEL_OK")
</pallas_src>

<mosaic_0001>
module attributes {stable_mosaic.version = 11 : i64} {
  func.func @_mha_kernel(%arg0: i32, %arg1: memref<16x32xf32, #tpu.memory_space<vmem>>, %arg2: memref<32x96xbf16, #tpu.memory_space<vmem>>, %arg3: memref<1x96xf32, #tpu.memory_space<vmem>>, %arg4: memref<4x8x32xbf16, #tpu.memory_space<vmem>>, %arg5: memref<1x32xf32, #tpu.memory_space<vmem>>, %arg6: memref<16x32xf32, #tpu.memory_space<vmem>>) attributes {dimension_semantics = [#tpu.dimension_semantics<parallel>], iteration_bounds = array<i64: 1>, scalar_prefetch = 0 : i64, scratch_operands = 0 : i64, tpu.core_type = #tpu.core_type<tc>, window_params = [{transform_indices = @transform_0, window_bounds = array<i64: 16, 32>}, {pipeline_mode = #tpu.pipeline_mode<synchronous>, transform_indices = @transform_1, window_bounds = array<i64: 32, 96>}, {pipeline_mode = #tpu.pipeline_mode<synchronous>, transform_indices = @transform_2, window_bounds = array<i64: 1, 96>}, {pipeline_mode = #tpu.pipeline_mode<synchronous>, transform_indices = @transform_3, window_bounds = array<i64: 4, 8, 32>}, {pipeline_mode = #tpu.pipeline_mode<synchronous>, transform_indices = @transform_4, window_bounds = array<i64: 1, 32>}, {transform_indices = @transform_5, window_bounds = array<i64: 16, 32>}]} {
    %c0 = arith.constant 0 : index
    %c0_0 = arith.constant 0 : index
    %0 = vector.load %arg1[%c0, %c0_0] : memref<16x32xf32, #tpu.memory_space<vmem>>, vector<16x32xf32>
    %1 = arith.truncf %0 : vector<16x32xf32> to vector<16x32xbf16>
    %c0_1 = arith.constant 0 : index
    %c0_2 = arith.constant 0 : index
    %2 = vector.load %arg2[%c0_1, %c0_2] : memref<32x96xbf16, #tpu.memory_space<vmem>>, vector<32x96xbf16>
    %cst = arith.constant dense<0.000000e+00> : vector<16x96xf32>
    %3 = tpu.matmul %1, %2, %cst {dimension_numbers = #tpu.dot_dimension_numbers<[1], [0], [0], [1], [0, 0, 1, 1], [], []>} : vector<16x32xbf16>, vector<32x96xbf16>, vector<16x96xf32> -> vector<16x96xf32>
    %c0_3 = arith.constant 0 : index
    %c0_4 = arith.constant 0 : index
    %4 = vector.load %arg3[%c0_3, %c0_4] : memref<1x96xf32, #tpu.memory_space<vmem>>, vector<1x96xf32>
    %5 = vector.broadcast %4 : vector<1x96xf32> to vector<16x96xf32>
    %6 = arith.addf %3, %5 : vector<16x96xf32>
    %7 = arith.truncf %6 : vector<16x96xf32> to vector<16x96xbf16>
    %8 = vector.shape_cast %7 : vector<16x96xbf16> to vector<2x8x96xbf16>
    %9 = tpu.iota {dimensions = array<i32: 0>} : vector<8x8xi32>
    %10 = tpu.iota {dimensions = array<i32: 1>} : vector<8x8xi32>
    %11 = arith.cmpi sge, %9, %10 : vector<8x8xi32>
    %cst_5 = arith.constant 1.000000e+00 : f32
    %cst_6 = arith.constant 0.000000e+00 : f32
    %12 = vector.broadcast %cst_5 : f32 to vector<8x8xf32>
    %13 = vector.broadcast %cst_6 : f32 to vector<8x8xf32>
    %14 = arith.select %11, %12, %13 : vector<8x8xi1>, vector<8x8xf32>
    %15 = vector.extract_strided_slice %8 {offsets = [0, 0, 0], sizes = [2, 8, 8], strides = [1, 1, 1]} : vector<2x8x96xbf16> to vector<2x8x8xbf16>
    %16 = vector.extract_strided_slice %8 {offsets = [0, 0, 32], sizes = [2, 8, 8], strides = [1, 1, 1]} : vector<2x8x96xbf16> to vector<2x8x8xbf16>
    %17 = vector.extract_strided_slice %8 {offsets = [0, 0, 64], sizes = [2, 8, 8], strides = [1, 1, 1]} : vector<2x8x96xbf16> to vector<2x8x8xbf16>
    %cst_7 = arith.constant dense<0.000000e+00> : vector<2x8x8xf32>
    %18 = tpu.matmul %15, %16, %cst_7 {dimension_numbers = #tpu.dot_dimension_numbers<[2], [2], [1], [1], [0, 0, 0, 1, 1, 1], [0], [0]>} : vector<2x8x8xbf16>, vector<2x8x8xbf16>, vector<2x8x8xf32> -> vector<2x8x8xf32>
    %19 = vector.shape_cast %14 : vector<8x8xf32> to vector<1x8x8xf32>
    %20 = vector.broadcast %19 : vector<1x8x8xf32> to vector<2x8x8xf32>
    %21 = arith.addf %18, %20 : vector<2x8x8xf32>
    %cst_8 = arith.constant dense<0xFF800000> : vector<2x8xf32>
    %22 = vector.multi_reduction <maximumf>, %21, %cst_8 [2] : vector<2x8x8xf32> to vector<2x8xf32>
    %23 = vector.shape_cast %22 : vector<2x8xf32> to vector<2x8x1xf32>
    %24 = vector.broadcast %23 : vector<2x8x1xf32> to vector<2x8x8xf32>
    %25 = arith.subf %21, %24 : vector<2x8x8xf32>
    %26 = math.exp %25 : vector<2x8x8xf32>
    %cst_9 = arith.constant dense<0.000000e+00> : vector<2x8xf32>
    %27 = vector.multi_reduction <add>, %26, %cst_9 [2] : vector<2x8x8xf32> to vector<2x8xf32>
    %28 = vector.shape_cast %27 : vector<2x8xf32> to vector<2x8x1xf32>
    %29 = tpu.reciprocal %28 {approx = true} : vector<2x8x1xf32> -> vector<2x8x1xf32>
    %30 = vector.broadcast %29 : vector<2x8x1xf32> to vector<2x8x8xf32>
    %31 = arith.mulf %26, %30 : vector<2x8x8xf32>
    %32 = arith.truncf %31 : vector<2x8x8xf32> to vector<2x8x8xbf16>
    %cst_10 = arith.constant dense<0.000000e+00> : vector<2x8x8xf32>
    %33 = tpu.matmul %32, %17, %cst_10 {dimension_numbers = #tpu.dot_dimension_numbers<[2], [1], [1], [2], [0, 0, 0, 1, 1, 2], [0], [0]>} : vector<2x8x8xbf16>, vector<2x8x8xbf16>, vector<2x8x8xf32> -> vector<2x8x8xf32>
    %34 = vector.shape_cast %33 : vector<2x8x8xf32> to vector<16x8xf32>
    %35 = arith.truncf %34 : vector<16x8xf32> to vector<16x8xbf16>
    %c0_11 = arith.constant 0 : index
    %c0_12 = arith.constant 0 : index
    %c0_13 = arith.constant 0 : index
    %36 = vector.load %arg4[%c0_11, %c0_12, %c0_13] : memref<4x8x32xbf16, #tpu.memory_space<vmem>>, vector<1x8x32xbf16>
    %37 = vector.shape_cast %36 : vector<1x8x32xbf16> to vector<8x32xbf16>
    %cst_14 = arith.constant dense<0.000000e+00> : vector<16x32xf32>
    %38 = tpu.matmul %35, %37, %cst_14 {dimension_numbers = #tpu.dot_dimension_numbers<[1], [0], [0], [1], [0, 0, 1, 1], [], []>} : vector<16x8xbf16>, vector<8x32xbf16>, vector<16x32xf32> -> vector<16x32xf32>
    %39 = vector.extract_strided_slice %8 {offsets = [0, 0, 8], sizes = [2, 8, 8], strides = [1, 1, 1]} : vector<2x8x96xbf16> to vector<2x8x8xbf16>
    %40 = vector.extract_strided_slice %8 {offsets = [0, 0, 40], sizes = [2, 8, 8], strides = [1, 1, 1]} : vector<2x8x96xbf16> to vector<2x8x8xbf16>
    %41 = vector.extract_strided_slice %8 {offsets = [0, 0, 72], sizes = [2, 8, 8], strides = [1, 1, 1]} : vector<2x8x96xbf16> to vector<2x8x8xbf16>
    %cst_15 = arith.constant dense<0.000000e+00> : vector<2x8x8xf32>
    %42 = tpu.matmul %39, %40, %cst_15 {dimension_numbers = #tpu.dot_dimension_numbers<[2], [2], [1], [1], [0, 0, 0, 1, 1, 1], [0], [0]>} : vector<2x8x8xbf16>, vector<2x8x8xbf16>, vector<2x8x8xf32> -> vector<2x8x8xf32>
    %43 = vector.shape_cast %14 : vector<8x8xf32> to vector<1x8x8xf32>
    %44 = vector.broadcast %43 : vector<1x8x8xf32> to vector<2x8x8xf32>
    %45 = arith.addf %42, %44 : vector<2x8x8xf32>
    %cst_16 = arith.constant dense<0xFF800000> : vector<2x8xf32>
    %46 = vector.multi_reduction <maximumf>, %45, %cst_16 [2] : vector<2x8x8xf32> to vector<2x8xf32>
    %47 = vector.shape_cast %46 : vector<2x8xf32> to vector<2x8x1xf32>
    %48 = vector.broadcast %47 : vector<2x8x1xf32> to vector<2x8x8xf32>
    %49 = arith.subf %45, %48 : vector<2x8x8xf32>
    %50 = math.exp %49 : vector<2x8x8xf32>
    %cst_17 = arith.constant dense<0.000000e+00> : vector<2x8xf32>
    %51 = vector.multi_reduction <add>, %50, %cst_17 [2] : vector<2x8x8xf32> to vector<2x8xf32>
    %52 = vector.shape_cast %51 : vector<2x8xf32> to vector<2x8x1xf32>
    %53 = tpu.reciprocal %52 {approx = true} : vector<2x8x1xf32> -> vector<2x8x1xf32>
    %54 = vector.broadcast %53 : vector<2x8x1xf32> to vector<2x8x8xf32>
    %55 = arith.mulf %50, %54 : vector<2x8x8xf32>
    %56 = arith.truncf %55 : vector<2x8x8xf32> to vector<2x8x8xbf16>
    %cst_18 = arith.constant dense<0.000000e+00> : vector<2x8x8xf32>
    %57 = tpu.matmul %56, %41, %cst_18 {dimension_numbers = #tpu.dot_dimension_numbers<[2], [1], [1], [2], [0, 0, 0, 1, 1, 2], [0], [0]>} : vector<2x8x8xbf16>, vector<2x8x8xbf16>, vector<2x8x8xf32> -> vector<2x8x8xf32>
    %58 = vector.shape_cast %57 : vector<2x8x8xf32> to vector<16x8xf32>
    %59 = arith.truncf %58 : vector<16x8xf32> to vector<16x8xbf16>
    %c1 = arith.constant 1 : index
    %c0_19 = arith.constant 0 : index
    %c0_20 = arith.constant 0 : index
    %60 = vector.load %arg4[%c1, %c0_19, %c0_20] : memref<4x8x32xbf16, #tpu.memory_space<vmem>>, vector<1x8x32xbf16>
    %61 = vector.shape_cast %60 : vector<1x8x32xbf16> to vector<8x32xbf16>
    %cst_21 = arith.constant dense<0.000000e+00> : vector<16x32xf32>
    %62 = tpu.matmul %59, %61, %cst_21 {dimension_numbers = #tpu.dot_dimension_numbers<[1], [0], [0], [1], [0, 0, 1, 1], [], []>} : vector<16x8xbf16>, vector<8x32xbf16>, vector<16x32xf32> -> vector<16x32xf32>
    %63 = arith.addf %38, %62 : vector<16x32xf32>
    %64 = vector.extract_strided_slice %8 {offsets = [0, 0, 16], sizes = [2, 8, 8], strides = [1, 1, 1]} : vector<2x8x96xbf16> to vector<2x8x8xbf16>
    %65 = vector.extract_strided_slice %8 {offsets = [0, 0, 48], sizes = [2, 8, 8], strides = [1, 1, 1]} : vector<2x8x96xbf16> to vector<2x8x8xbf16>
    %66 = vector.extract_strided_slice %8 {offsets = [0, 0, 80], sizes = [2, 8, 8], strides = [1, 1, 1]} : vector<2x8x96xbf16> to vector<2x8x8xbf16>
    %cst_22 = arith.constant dense<0.000000e+00> : vector<2x8x8xf32>
    %67 = tpu.matmul %64, %65, %cst_22 {dimension_numbers = #tpu.dot_dimension_numbers<[2], [2], [1], [1], [0, 0, 0, 1, 1, 1], [0], [0]>} : vector<2x8x8xbf16>, vector<2x8x8xbf16>, vector<2x8x8xf32> -> vector<2x8x8xf32>
    %68 = vector.shape_cast %14 : vector<8x8xf32> to vector<1x8x8xf32>
    %69 = vector.broadcast %68 : vector<1x8x8xf32> to vector<2x8x8xf32>
    %70 = arith.addf %67, %69 : vector<2x8x8xf32>
    %cst_23 = arith.constant dense<0xFF800000> : vector<2x8xf32>
    %71 = vector.multi_reduction <maximumf>, %70, %cst_23 [2] : vector<2x8x8xf32> to vector<2x8xf32>
    %72 = vector.shape_cast %71 : vector<2x8xf32> to vector<2x8x1xf32>
    %73 = vector.broadcast %72 : vector<2x8x1xf32> to vector<2x8x8xf32>
    %74 = arith.subf %70, %73 : vector<2x8x8xf32>
    %75 = math.exp %74 : vector<2x8x8xf32>
    %cst_24 = arith.constant dense<0.000000e+00> : vector<2x8xf32>
    %76 = vector.multi_reduction <add>, %75, %cst_24 [2] : vector<2x8x8xf32> to vector<2x8xf32>
    %77 = vector.shape_cast %76 : vector<2x8xf32> to vector<2x8x1xf32>
    %78 = tpu.reciprocal %77 {approx = true} : vector<2x8x1xf32> -> vector<2x8x1xf32>
    %79 = vector.broadcast %78 : vector<2x8x1xf32> to vector<2x8x8xf32>
    %80 = arith.mulf %75, %79 : vector<2x8x8xf32>
    %81 = arith.truncf %80 : vector<2x8x8xf32> to vector<2x8x8xbf16>
    %cst_25 = arith.constant dense<0.000000e+00> : vector<2x8x8xf32>
    %82 = tpu.matmul %81, %66, %cst_25 {dimension_numbers = #tpu.dot_dimension_numbers<[2], [1], [1], [2], [0, 0, 0, 1, 1, 2], [0], [0]>} : vector<2x8x8xbf16>, vector<2x8x8xbf16>, vector<2x8x8xf32> -> vector<2x8x8xf32>
    %83 = vector.shape_cast %82 : vector<2x8x8xf32> to vector<16x8xf32>
    %84 = arith.truncf %83 : vector<16x8xf32> to vector<16x8xbf16>
    %c2 = arith.constant 2 : index
    %c0_26 = arith.constant 0 : index
    %c0_27 = arith.constant 0 : index
    %85 = vector.load %arg4[%c2, %c0_26, %c0_27] : memref<4x8x32xbf16, #tpu.memory_space<vmem>>, vector<1x8x32xbf16>
    %86 = vector.shape_cast %85 : vector<1x8x32xbf16> to vector<8x32xbf16>
    %cst_28 = arith.constant dense<0.000000e+00> : vector<16x32xf32>
    %87 = tpu.matmul %84, %86, %cst_28 {dimension_numbers = #tpu.dot_dimension_numbers<[1], [0], [0], [1], [0, 0, 1, 1], [], []>} : vector<16x8xbf16>, vector<8x32xbf16>, vector<16x32xf32> -> vector<16x32xf32>
    %88 = arith.addf %63, %87 : vector<16x32xf32>
    %89 = vector.extract_strided_slice %8 {offsets = [0, 0, 24], sizes = [2, 8, 8], strides = [1, 1, 1]} : vector<2x8x96xbf16> to vector<2x8x8xbf16>
    %90 = vector.extract_strided_slice %8 {offsets = [0, 0, 56], sizes = [2, 8, 8], strides = [1, 1, 1]} : vector<2x8x96xbf16> to vector<2x8x8xbf16>
    %91 = vector.extract_strided_slice %8 {offsets = [0, 0, 88], sizes = [2, 8, 8], strides = [1, 1, 1]} : vector<2x8x96xbf16> to vector<2x8x8xbf16>
    %cst_29 = arith.constant dense<0.000000e+00> : vector<2x8x8xf32>
    %92 = tpu.matmul %89, %90, %cst_29 {dimension_numbers = #tpu.dot_dimension_numbers<[2], [2], [1], [1], [0, 0, 0, 1, 1, 1], [0], [0]>} : vector<2x8x8xbf16>, vector<2x8x8xbf16>, vector<2x8x8xf32> -> vector<2x8x8xf32>
    %93 = vector.shape_cast %14 : vector<8x8xf32> to vector<1x8x8xf32>
    %94 = vector.broadcast %93 : vector<1x8x8xf32> to vector<2x8x8xf32>
    %95 = arith.addf %92, %94 : vector<2x8x8xf32>
    %cst_30 = arith.constant dense<0xFF800000> : vector<2x8xf32>
    %96 = vector.multi_reduction <maximumf>, %95, %cst_30 [2] : vector<2x8x8xf32> to vector<2x8xf32>
    %97 = vector.shape_cast %96 : vector<2x8xf32> to vector<2x8x1xf32>
    %98 = vector.broadcast %97 : vector<2x8x1xf32> to vector<2x8x8xf32>
    %99 = arith.subf %95, %98 : vector<2x8x8xf32>
    %100 = math.exp %99 : vector<2x8x8xf32>
    %cst_31 = arith.constant dense<0.000000e+00> : vector<2x8xf32>
    %101 = vector.multi_reduction <add>, %100, %cst_31 [2] : vector<2x8x8xf32> to vector<2x8xf32>
    %102 = vector.shape_cast %101 : vector<2x8xf32> to vector<2x8x1xf32>
    %103 = tpu.reciprocal %102 {approx = true} : vector<2x8x1xf32> -> vector<2x8x1xf32>
    %104 = vector.broadcast %103 : vector<2x8x1xf32> to vector<2x8x8xf32>
    %105 = arith.mulf %100, %104 : vector<2x8x8xf32>
    %106 = arith.truncf %105 : vector<2x8x8xf32> to vector<2x8x8xbf16>
    %cst_32 = arith.constant dense<0.000000e+00> : vector<2x8x8xf32>
    %107 = tpu.matmul %106, %91, %cst_32 {dimension_numbers = #tpu.dot_dimension_numbers<[2], [1], [1], [2], [0, 0, 0, 1, 1, 2], [0], [0]>} : vector<2x8x8xbf16>, vector<2x8x8xbf16>, vector<2x8x8xf32> -> vector<2x8x8xf32>
    %108 = vector.shape_cast %107 : vector<2x8x8xf32> to vector<16x8xf32>
    %109 = arith.truncf %108 : vector<16x8xf32> to vector<16x8xbf16>
    %c3 = arith.constant 3 : index
    %c0_33 = arith.constant 0 : index
    %c0_34 = arith.constant 0 : index
    %110 = vector.load %arg4[%c3, %c0_33, %c0_34] : memref<4x8x32xbf16, #tpu.memory_space<vmem>>, vector<1x8x32xbf16>
    %111 = vector.shape_cast %110 : vector<1x8x32xbf16> to vector<8x32xbf16>
    %cst_35 = arith.constant dense<0.000000e+00> : vector<16x32xf32>
    %112 = tpu.matmul %109, %111, %cst_35 {dimension_numbers = #tpu.dot_dimension_numbers<[1], [0], [0], [1], [0, 0, 1, 1], [], []>} : vector<16x8xbf16>, vector<8x32xbf16>, vector<16x32xf32> -> vector<16x32xf32>
    %113 = arith.addf %88, %112 : vector<16x32xf32>
    %c0_36 = arith.constant 0 : index
    %c0_37 = arith.constant 0 : index
    %114 = vector.load %arg5[%c0_36, %c0_37] : memref<1x32xf32, #tpu.memory_space<vmem>>, vector<1x32xf32>
    %115 = vector.broadcast %114 : vector<1x32xf32> to vector<16x32xf32>
    %116 = arith.addf %113, %115 : vector<16x32xf32>
    %c0_38 = arith.constant 0 : index
    %c0_39 = arith.constant 0 : index
    %117 = vector.load %arg6[%c0_38, %c0_39] : memref<16x32xf32, #tpu.memory_space<vmem>>, vector<16x32xf32>
    tpu.vector_store %arg6[%c0_38, %c0_39], %116 {strides = array<i32>} : memref<16x32xf32, #tpu.memory_space<vmem>>, vector<16x32xf32>,
    return
  }
  func.func @transform_0(%arg0: i32) -> (i32, i32) {
    %c0_i32 = arith.constant 0 : i32
    %c0_i32_0 = arith.constant 0 : i32
    return %arg0, %c0_i32 : i32, i32
  }
  func.func @transform_1(%arg0: i32) -> (i32, i32) {
    %c0_i32 = arith.constant 0 : i32
    %c0_i32_0 = arith.constant 0 : i32
    %c0_i32_1 = arith.constant 0 : i32
    return %c0_i32, %c0_i32_0 : i32, i32
  }
  func.func @transform_2(%arg0: i32) -> (i32, i32) {
    %c0_i32 = arith.constant 0 : i32
    %c0_i32_0 = arith.constant 0 : i32
    %c0_i32_1 = arith.constant 0 : i32
    return %c0_i32, %c0_i32_0 : i32, i32
  }
  func.func @transform_3(%arg0: i32) -> (i32, i32, i32) {
    %c0_i32 = arith.constant 0 : i32
    %c0_i32_0 = arith.constant 0 : i32
    %c0_i32_1 = arith.constant 0 : i32
    %c0_i32_2 = arith.constant 0 : i32
    return %c0_i32, %c0_i32_0, %c0_i32_1 : i32, i32, i32
  }
  func.func @transform_4(%arg0: i32) -> (i32, i32) {
    %c0_i32 = arith.constant 0 : i32
    %c0_i32_0 = arith.constant 0 : i32
    %c0_i32_1 = arith.constant 0 : i32
    return %c0_i32, %c0_i32_0 : i32, i32
  }
  func.func @transform_5(%arg0: i32) -> (i32, i32) {
    %c0_i32 = arith.constant 0 : i32
    %c0_i32_0 = arith.constant 0 : i32
    return %arg0, %c0_i32 : i32, i32
  }
}

</mosaic_0001>

<llo_original>
// kernel: tpu_custom_call.1
$region0: #{tpu_custom_call.1}
  #allocation0 [shape = 'u32[]', space=smem, size = 0x4, offset = 0x4, fixed_abs, tag = 'smem constant byte address 0x4 - core index']
  #allocation1 [shape = 'u32[72,128]{1,0:T(1,128)}', space=vmem, size = 0x9000, scoped, tag = 'internal scratch']
  %s0 = inlined_call_operand.hbm [shape: f32[16,32], index: 0, kind: input, shape index: {}]
  %s1 = inlined_call_operand.hbm [shape: bf16[32,96], index: 1, kind: input, shape index: {}]
  %s2 = inlined_call_operand.vmem [shape: f32[1,96], index: 2, kind: input, shape index: {}]
  %s3 = inlined_call_operand.hbm [shape: bf16[4,8,32], index: 3, kind: input, shape index: {}]
  %s4 = inlined_call_operand.vmem [shape: f32[1,32], index: 4, kind: input, shape index: {}]
  %s5 = inlined_call_operand.hbm [shape: f32[16,32], index: 5, kind: output, shape index: {}]
  %s6 = sld [smem:[#allocation0]]
  $region42: #{tpu_custom_call.1} parent=0
    _
  %s8 = ssub.s32 1, %s6
  %s9 = scalar_select 0, %s8, %s6
  $region1: #{tpu_custom_call.1} parent=0
    #allocation2 [shape = 'u8[8192]{0}', space=vmem, size = 0x2000, scoped, tag = 'input window, operand 0, single buffered']
    #allocation3 [shape = 's32[1]{0}', space=sflag, size = 0x4, scoped, tag = 'scoped memory for tpu_custom_call.1']
    #allocation4 [shape = 's32[1]{0}', space=sflag, size = 0x4, scoped, tag = 'scoped memory for tpu_custom_call.1']
    #allocation5 [shape = 'u8[8192]{0}', space=vmem, size = 0x2000, scoped, tag = 'input window, operand 1, single buffered']
    #allocation6 [shape = 's32[1]{0}', space=sflag, size = 0x4, scoped, tag = 'scoped memory for tpu_custom_call.1']
    #allocation7 [shape = 'u8[8192]{0}', space=vmem, size = 0x2000, scoped, tag = 'input window, operand 3, single buffered']
    #allocation8 [shape = 'u8[8192]{0}', space=vmem, size = 0x2000, scoped, tag = 'output window, operand 0, single buffered']
    %10 = vsyncpa [#allocation3], 0
    %11 = vsyncpa [#allocation6], 0
    %12 = vsyncpa [#allocation4], 0
    // Predicated region
    $region2: #{tpu_custom_call.1} parent=1 // pred_check
      _
    $region3: #{tpu_custom_call.1} parent=1 // pred_check_branch
      %14 = sbr.rel (0) target = $region5
    $region4: #{tpu_custom_call.1} parent=1 // pred_region
      %16 = vsyncadd [#allocation3], 0
      %s17 = sshll.u32 %s0, 4
      %s18 = int_to_ptr.hbm [resolvable:$true] %s17
      %s19 = sshll.u32 [#allocation2], 4
      %s20 = int_to_ptr.vmem [resolvable:$true] %s19
      %25 = dma.hbm_to_vmem [thread:$0]  %s18, 256, %s20, [#allocation3], 128, 128, 8
    $region5: #{tpu_custom_call.1} parent=1 // pred_fallthru
      _
    // Predicated region
    $region6: #{tpu_custom_call.1} parent=1 // pred_check
      _
    $region7: #{tpu_custom_call.1} parent=1 // pred_check_branch
      %27 = sbr.rel (0) target = $region9
    $region8: #{tpu_custom_call.1} parent=1 // pred_region
      %29 = vsyncadd [#allocation6], 0
      %s30 = sshll.u32 %s1, 4
      %s31 = int_to_ptr.hbm [resolvable:$true] %s30
      %s32 = sshll.u32 [#allocation5], 4
      %s33 = int_to_ptr.vmem [resolvable:$true] %s32
      %38 = dma.hbm_to_vmem [thread:$0]  %s31, 256, %s33, [#allocation6], 64, 64, 4
    $region9: #{tpu_custom_call.1} parent=1 // pred_fallthru
      _
    // Predicated region
    $region10: #{tpu_custom_call.1} parent=1 // pred_check
      _
    $region11: #{tpu_custom_call.1} parent=1 // pred_check_branch
      %40 = sbr.rel (0) target = $region13
    $region12: #{tpu_custom_call.1} parent=1 // pred_region
      _
    $region13: #{tpu_custom_call.1} parent=1 // pred_fallthru
      _
    // Predicated region
    $region14: #{tpu_custom_call.1} parent=1 // pred_check
      _
    $region15: #{tpu_custom_call.1} parent=1 // pred_check_branch
      %42 = sbr.rel (0) target = $region17
    $region16: #{tpu_custom_call.1} parent=1 // pred_region
      %44 = vsyncadd [#allocation6], 0
      %s45 = sshll.u32 %s3, 4
      %s46 = int_to_ptr.hbm [resolvable:$true] %s45
      %s47 = sshll.u32 [#allocation7], 4
      %s48 = int_to_ptr.vmem [resolvable:$true] %s47
      %53 = dma.hbm_to_vmem [thread:$0]  %s46, 256, %s48, [#allocation6], 64, 64, 4
    $region17: #{tpu_custom_call.1} parent=1 // pred_fallthru
      _
    // Predicated region
    $region18: #{tpu_custom_call.1} parent=1 // pred_check
      _
    $region19: #{tpu_custom_call.1} parent=1 // pred_check_branch
      %55 = sbr.rel (0) target = $region21
    $region20: #{tpu_custom_call.1} parent=1 // pred_region
      _
    $region21: #{tpu_custom_call.1} parent=1 // pred_fallthru
      _
    // Predicated region
    $region22: #{tpu_custom_call.1} parent=1 // pred_check
      _
    $region23: #{tpu_custom_call.1} parent=1 // pred_check_branch
      %57 = sbr.rel (0) target = $region25
    $region24: #{tpu_custom_call.1} parent=1 // pred_region
      %59 = dma.done [#allocation3], 256
    $region25: #{tpu_custom_call.1} parent=1 // pred_fallthru
      _
    // Predicated region
    $region26: #{tpu_custom_call.1} parent=1 // pred_check
      _
    $region27: #{tpu_custom_call.1} parent=1 // pred_check_branch
      %61 = sbr.rel (0) target = $region29
    $region28: #{tpu_custom_call.1} parent=1 // pred_region
      %63 = dma.done [#allocation6], 256
    $region29: #{tpu_custom_call.1} parent=1 // pred_fallthru
      _
    // Predicated region
    $region30: #{tpu_custom_call.1} parent=1 // pred_check
      _
    $region31: #{tpu_custom_call.1} parent=1 // pred_check_branch
      %65 = sbr.rel (0) target = $region33
    $region32: #{tpu_custom_call.1} parent=1 // pred_region
      %67 = dma.done [#allocation6], 256
    $region33: #{tpu_custom_call.1} parent=1 // pred_fallthru
      _
    %v69 = vld [vmem:[#allocation2] sm:$0xff]
    %v70 = vld [vmem:[#allocation2 + $0x8] sm:$0xff]
    %v71 = vpack.c.bf16 %v70, %v69
    %v72 = vld [vmem:[#allocation5] sm:$0xf]
    %v73 = vld [vmem:[#allocation5 + $0x4] sm:$0xf]
    %v74 = vld [vmem:[#allocation5 + $0x8] sm:$0xf]
    %v75 = vld [vmem:[#allocation5 + $0xc] sm:$0xf]
    %v76 = vld [vmem:[%s2] sm:$0x1]
    %v78 = vperm.slane %v76, 0
    %v84 = vunpack.c.l.b16 %v72
    %v85 = vunpack.c.l.b16 %v73
    %v86 = vunpack.c.l.b16 %v74
    %v87 = vunpack.c.l.b16 %v75
    %v88 = vpack.c.b16 %v85, %v84
    %v89 = vpack.c.b16 %v87, %v86
    %vm92 = vcmask 261120
    %v94 = vsel %vm92, %v71, 0
    %96 = vmatpush.bf16.msra.mxu0 0
    %97 = vmatpush.bf16.msra.mxu0 0
    %98 = vmatpush.bf16.msra.mxu0 0
    %99 = vmatpush.bf16.msra.mxu0 0
    %100 = vmatpush.bf16.msra.mxu0 0
    %101 = vmatpush.bf16.msra.mxu0 0
    %102 = vmatpush.bf16.msra.mxu0 %v89
    %103 = vmatpush.bf16.msra.mxu0 %v88
    %104 = vmatmul.bf16.gmra.mxu0 %v94
    %v105 = vpop.f32.mrf.mxu0
    %v106 = vadd.f32 %v78, %v105
    %v107 = vpop.f32.mrf.mxu0
    %v108 = vadd.f32 %v78, %v107
    %109 = vdwg.mxu0
    %v110 = vpack.c.bf16 %v106, %v106
    %v111 = vpack.c.bf16 %v108, %v108
    %v112 = vlaneseq
    %v113 = vshrl.u32 %v112, 7
    %v114 = vlaneseq
    %v115 = vand.u32 %v114, 127
    %vm116 = vcmp.ge.s32.totalorder %v113, %v115
    %v117 = vsel %vm116, 1.0, 0.0
    %v119 = vunpack.c.l.b16 %v110
    %v120 = vpack.c.b16 %v119, %v119
    %121 = vrot.lane.b32.xlu0 %v120, 96
    %v122 = vpop.permute.xlu0 %121
    %vm123 = vcmask 64512
    %v125 = vsel %vm123, %v110, 0
    %v128 = vsel %vm123, %v122, 0
    %130 = vmatpush.bf16.xpose.msra.mxu0 0
    %131 = vmatpush.bf16.xpose.msra.mxu0 0
    %132 = vmatpush.bf16.xpose.msra.mxu0 0
    %133 = vmatpush.bf16.xpose.msra.mxu0 0
    %134 = vmatpush.bf16.xpose.msra.mxu0 0
    %135 = vmatpush.bf16.xpose.msra.mxu0 0
    %136 = vmatpush.bf16.xpose.msra.mxu0 0
    %137 = vmatpush.bf16.xpose.msra.mxu0 %v128
    %138 = vmatmul.bf16.gmra.mxu0 %v125
    %v139 = vpop.f32.mrf.mxu0
    %v140 = vadd.f32 %v117, %v139
    %v141 = vpop.f32.mrf.mxu0
    %142 = vdwg.mxu0
    %v144 = vunpack.c.l.b16 %v111
    %v145 = vpack.c.b16 %v144, %v144
    %146 = vrot.lane.b32.xlu0 %v145, 96
    %v147 = vpop.permute.xlu0 %146
    %v149 = vsel %vm123, %v111, 0
    %v152 = vsel %vm123, %v147, 0
    %154 = vmatpush.bf16.xpose.msra.mxu0 0
    %155 = vmatpush.bf16.xpose.msra.mxu0 0
    %156 = vmatpush.bf16.xpose.msra.mxu0 0
    %157 = vmatpush.bf16.xpose.msra.mxu0 0
    %158 = vmatpush.bf16.xpose.msra.mxu0 0
    %159 = vmatpush.bf16.xpose.msra.mxu0 0
    %160 = vmatpush.bf16.xpose.msra.mxu0 0
    %161 = vmatpush.bf16.xpose.msra.mxu0 %v152
    %162 = vmatmul.bf16.gmra.mxu0 %v149
    %v163 = vpop.f32.mrf.mxu0
    %v164 = vadd.f32 %v117, %v163
    %v165 = vpop.f32.mrf.mxu0
    %166 = vdwg.mxu0
    %v167 = vsel %vm123, %v140, -inf
    %168 = vmax.xlane.f32.xlu0 %v167
    %v169 = vpop.xlane.xlu0 %168
    %v170 = vsel %vm123, %v164, -inf
    %171 = vmax.xlane.f32.xlu0 %v170
    %v172 = vpop.xlane.xlu0 %171
    %v173 = vsub.f32 %v140, %v169
    %v174 = vsub.f32 %v164, %v172
    %v175 = vmul.f32 %v173, 1.442695
    %v176 = vpow.pop %v175
    %v177 = vmul.f32 %v174, 1.442695
    %v178 = vpow.pop %v177
    %v179 = vsel %vm123, %v176, 0.0
    %180 = vadd.xlane.f32.xlu0 %v179
    %v181 = vpop.xlane.xlu0 %180
    %v182 = vsel %vm123, %v178, 0.0
    %183 = vadd.xlane.f32.xlu0 %v182
    %v184 = vpop.xlane.xlu0 %183
    %v185 = vrcp.pop %v181
    %v186 = vrcp.pop %v184
    %v187 = vmul.f32 %v176, %v185
    %v188 = vmul.f32 %v178, %v186
    %v189 = vpack.c.bf16 %v187, %v187
    %v190 = vpack.c.bf16 %v188, %v188
    %191 = vrot.lane.b32.xlu0 %v120, 64
    %v192 = vpop.permute.xlu0 %191
    %v194 = vsel %vm123, %v189, 0
    %vm196 = vcmask 1043456
    %v198 = vsel %vm196, %v192, 0
    %200 = vmatpush.bf16.msra.mxu0 0
    %201 = vmatpush.bf16.msra.mxu0 0
    %202 = vmatpush.bf16.msra.mxu0 0
    %203 = vmatpush.bf16.msra.mxu0 0
    %204 = vmatpush.bf16.msra.mxu0 0
    %205 = vmatpush.bf16.msra.mxu0 0
    %206 = vmatpush.bf16.msra.mxu0 0
    %207 = vmatpush.bf16.msra.mxu0 %v198
    %208 = vmatmul.bf16.gmra.mxu0 %v194
    %v209 = vpop.f32.mrf.mxu0
    %v210 = vadd.f32 0.0, %v209
    %v211 = vpop.f32.mrf.mxu0
    %212 = vdwg.mxu0
    %213 = vrot.lane.b32.xlu0 %v145, 64
    %v214 = vpop.permute.xlu0 %213
    %v216 = vsel %vm123, %v190, 0
    %v219 = vsel %vm196, %v214, 0
    %221 = vmatpush.bf16.msra.mxu0 0
    %222 = vmatpush.bf16.msra.mxu0 0
    %223 = vmatpush.bf16.msra.mxu0 0
    %224 = vmatpush.bf16.msra.mxu0 0
    %225 = vmatpush.bf16.msra.mxu0 0
    %226 = vmatpush.bf16.msra.mxu0 0
    %227 = vmatpush.bf16.msra.mxu0 0
    %228 = vmatpush.bf16.msra.mxu0 %v219
    %229 = vmatmul.bf16.gmra.mxu0 %v216
    %v230 = vpop.f32.mrf.mxu0
    %v231 = vadd.f32 0.0, %v230
    %v232 = vpop.f32.mrf.mxu0
    %233 = vdwg.mxu0
    %v234 = vpack.c.bf16 %v231, %v210
    %v235 = vld [vmem:[#allocation7] sm:$0xf]
    %236 = vrot.lane.b32.xlu0 %v120, 120
    %v237 = vpop.permute.xlu0 %236
    %238 = vrot.lane.b32.xlu0 %v120, 88
    %v239 = vpop.permute.xlu0 %238
    %v241 = vsel %vm123, %v237, 0
    %v244 = vsel %vm123, %v239, 0
    %246 = vmatpush.bf16.xpose.msra.mxu0 0
    %247 = vmatpush.bf16.xpose.msra.mxu0 0
    %248 = vmatpush.bf16.xpose.msra.mxu0 0
    %249 = vmatpush.bf16.xpose.msra.mxu0 0
    %250 = vmatpush.bf16.xpose.msra.mxu0 0
    %251 = vmatpush.bf16.xpose.msra.mxu0 0
    %252 = vmatpush.bf16.xpose.msra.mxu0 0
    %253 = vmatpush.bf16.xpose.msra.mxu0 %v244
    %254 = vmatmul.bf16.gmra.mxu0 %v241
    %v255 = vpop.f32.mrf.mxu0
    %v256 = vadd.f32 %v117, %v255
    %v257 = vpop.f32.mrf.mxu0
    %258 = vdwg.mxu0
    %259 = vrot.lane.b32.xlu0 %v145, 120
    %v260 = vpop.permute.xlu0 %259
    %261 = vrot.lane.b32.xlu0 %v145, 88
    %v262 = vpop.permute.xlu0 %261
    %v264 = vsel %vm123, %v260, 0
    %v267 = vsel %vm123, %v262, 0
    %269 = vmatpush.bf16.xpose.msra.mxu0 0
    %270 = vmatpush.bf16.xpose.msra.mxu0 0
    %271 = vmatpush.bf16.xpose.msra.mxu0 0
    %272 = vmatpush.bf16.xpose.msra.mxu0 0
    %273 = vmatpush.bf16.xpose.msra.mxu0 0
    %274 = vmatpush.bf16.xpose.msra.mxu0 0
    %275 = vmatpush.bf16.xpose.msra.mxu0 0
    %276 = vmatpush.bf16.xpose.msra.mxu0 %v267
    %277 = vmatmul.bf16.gmra.mxu0 %v264
    %v278 = vpop.f32.mrf.mxu0
    %v279 = vadd.f32 %v117, %v278
    %v280 = vpop.f32.mrf.mxu0
    %281 = vdwg.mxu0
    %v282 = vsel %vm123, %v256, -inf
    %283 = vmax.xlane.f32.xlu0 %v282
    %v284 = vpop.xlane.xlu0 %283
    %v285 = vsel %vm123, %v279, -inf
    %286 = vmax.xlane.f32.xlu0 %v285
    %v287 = vpop.xlane.xlu0 %286
    %v288 = vsub.f32 %v256, %v284
    %v289 = vsub.f32 %v279, %v287
    %v290 = vmul.f32 %v288, 1.442695
    %v291 = vpow.pop %v290
    %v292 = vmul.f32 %v289, 1.442695
    %v293 = vpow.pop %v292
    %v294 = vsel %vm123, %v291, 0.0
    %295 = vadd.xlane.f32.xlu0 %v294
    %v296 = vpop.xlane.xlu0 %295
    %v297 = vsel %vm123, %v293, 0.0
    %298 = vadd.xlane.f32.xlu0 %v297
    %v299 = vpop.xlane.xlu0 %298
    %v300 = vrcp.pop %v296
    %v301 = vrcp.pop %v299
    %v302 = vmul.f32 %v291, %v300
    %v303 = vmul.f32 %v293, %v301
    %v304 = vpack.c.bf16 %v302, %v302
    %v305 = vpack.c.bf16 %v303, %v303
    %306 = vrot.lane.b32.xlu0 %v120, 56
    %v307 = vpop.permute.xlu0 %306
    %v309 = vsel %vm123, %v304, 0
    %v312 = vsel %vm196, %v307, 0
    %314 = vmatpush.bf16.msra.mxu0 0
    %315 = vmatpush.bf16.msra.mxu0 0
    %316 = vmatpush.bf16.msra.mxu0 0
    %317 = vmatpush.bf16.msra.mxu0 0
    %318 = vmatpush.bf16.msra.mxu0 0
    %319 = vmatpush.bf16.msra.mxu0 0
    %320 = vmatpush.bf16.msra.mxu0 0
    %321 = vmatpush.bf16.msra.mxu0 %v312
    %322 = vmatmul.bf16.gmra.mxu0 %v309
    %v323 = vpop.f32.mrf.mxu0
    %v324 = vadd.f32 0.0, %v323
    %v325 = vpop.f32.mrf.mxu0
    %326 = vdwg.mxu0
    %327 = vrot.lane.b32.xlu0 %v145, 56
    %v328 = vpop.permute.xlu0 %327
    %v330 = vsel %vm123, %v305, 0
    %v333 = vsel %vm196, %v328, 0
    %335 = vmatpush.bf16.msra.mxu0 0
    %336 = vmatpush.bf16.msra.mxu0 0
    %337 = vmatpush.bf16.msra.mxu0 0
    %338 = vmatpush.bf16.msra.mxu0 0
    %339 = vmatpush.bf16.msra.mxu0 0
    %340 = vmatpush.bf16.msra.mxu0 0
    %341 = vmatpush.bf16.msra.mxu0 0
    %342 = vmatpush.bf16.msra.mxu0 %v333
    %343 = vmatmul.bf16.gmra.mxu0 %v330
    %v344 = vpop.f32.mrf.mxu0
    %v345 = vadd.f32 0.0, %v344
    %v346 = vpop.f32.mrf.mxu0
    %347 = vdwg.mxu0
    %v348 = vpack.c.bf16 %v345, %v324
    %s349 = scalar_lea.vmem [#allocation7], 4
    %v350 = vld [vmem:[%s349] sm:$0xf]
    %v352 = vsel %vm123, %v348, 0
    %v355 = vsel %vm196, %v350, 0
    %357 = vmatpush.bf16.msra.mxu0 0
    %358 = vmatpush.bf16.msra.mxu0 0
    %359 = vmatpush.bf16.msra.mxu0 0
    %360 = vmatpush.bf16.msra.mxu0 0
    %361 = vmatpush.bf16.msra.mxu0 0
    %362 = vmatpush.bf16.msra.mxu0 0
    %363 = vmatpush.bf16.msra.mxu0 0
    %364 = vmatpush.bf16.msra.mxu0 %v355
    %365 = vmatmul.bf16.gmra.mxu0 %v352
    %v366 = vpop.f32.mrf.mxu0
    %v367 = vadd.f32 0.0, %v366
    %v368 = vpop.f32.mrf.mxu0
    %v369 = vadd.f32 0.0, %v368
    %370 = vdwg.mxu0
    %v372 = vsel %vm123, %v234, 0
    %v375 = vsel %vm196, %v235, 0
    %377 = vmatpush.bf16.msra.mxu0 0
    %378 = vmatpush.bf16.msra.mxu0 0
    %379 = vmatpush.bf16.msra.mxu0 0
    %380 = vmatpush.bf16.msra.mxu0 0
    %381 = vmatpush.bf16.msra.mxu0 0
    %382 = vmatpush.bf16.msra.mxu0 0
    %383 = vmatpush.bf16.msra.mxu0 0
    %384 = vmatpush.bf16.msra.mxu0 %v375
    %385 = vmatmul.bf16.gmra.mxu0 %v372
    %v386 = vpop.f32.mrf.mxu0
    %v387 = vadd.f32 %v367, %v386
    %v388 = vpop.f32.mrf.mxu0
    %v389 = vadd.f32 %v369, %v388
    %390 = vdwg.mxu0
    %391 = vrot.lane.b32.xlu0 %v120, 112
    %v392 = vpop.permute.xlu0 %391
    %393 = vrot.lane.b32.xlu0 %v120, 80
    %v394 = vpop.permute.xlu0 %393
    %v396 = vsel %vm123, %v392, 0
    %v399 = vsel %vm123, %v394, 0
    %401 = vmatpush.bf16.xpose.msra.mxu0 0
    %402 = vmatpush.bf16.xpose.msra.mxu0 0
    %403 = vmatpush.bf16.xpose.msra.mxu0 0
    %404 = vmatpush.bf16.xpose.msra.mxu0 0
    %405 = vmatpush.bf16.xpose.msra.mxu0 0
    %406 = vmatpush.bf16.xpose.msra.mxu0 0
    %407 = vmatpush.bf16.xpose.msra.mxu0 0
    %408 = vmatpush.bf16.xpose.msra.mxu0 %v399
    %409 = vmatmul.bf16.gmra.mxu0 %v396
    %v410 = vpop.f32.mrf.mxu0
    %v411 = vadd.f32 %v117, %v410
    %v412 = vpop.f32.mrf.mxu0
    %413 = vdwg.mxu0
    %414 = vrot.lane.b32.xlu0 %v145, 112
    %v415 = vpop.permute.xlu0 %414
    %416 = vrot.lane.b32.xlu0 %v145, 80
    %v417 = vpop.permute.xlu0 %416
    %v419 = vsel %vm123, %v415, 0
    %v422 = vsel %vm123, %v417, 0
    %424 = vmatpush.bf16.xpose.msra.mxu0 0
    %425 = vmatpush.bf16.xpose.msra.mxu0 0
    %426 = vmatpush.bf16.xpose.msra.mxu0 0
    %427 = vmatpush.bf16.xpose.msra.mxu0 0
    %428 = vmatpush.bf16.xpose.msra.mxu0 0
    %429 = vmatpush.bf16.xpose.msra.mxu0 0
    %430 = vmatpush.bf16.xpose.msra.mxu0 0
    %431 = vmatpush.bf16.xpose.msra.mxu0 %v422
    %432 = vmatmul.bf16.gmra.mxu0 %v419
    %v433 = vpop.f32.mrf.mxu0
    %v434 = vadd.f32 %v117, %v433
    %v435 = vpop.f32.mrf.mxu0
    %436 = vdwg.mxu0
    %v437 = vsel %vm123, %v411, -inf
    %438 = vmax.xlane.f32.xlu0 %v437
    %v439 = vpop.xlane.xlu0 %438
    %v440 = vsel %vm123, %v434, -inf
    %441 = vmax.xlane.f32.xlu0 %v440
    %v442 = vpop.xlane.xlu0 %441
    %v443 = vsub.f32 %v411, %v439
    %v444 = vsub.f32 %v434, %v442
    %v445 = vmul.f32 %v443, 1.442695
    %v446 = vpow.pop %v445
    %v447 = vmul.f32 %v444, 1.442695
    %v448 = vpow.pop %v447
    %v449 = vsel %vm123, %v446, 0.0
    %450 = vadd.xlane.f32.xlu0 %v449
    %v451 = vpop.xlane.xlu0 %450
    %v452 = vsel %vm123, %v448, 0.0
    %453 = vadd.xlane.f32.xlu0 %v452
    %v454 = vpop.xlane.xlu0 %453
    %v455 = vrcp.pop %v451
    %v456 = vrcp.pop %v454
    %v457 = vmul.f32 %v446, %v455
    %v458 = vmul.f32 %v448, %v456
    %v459 = vpack.c.bf16 %v457, %v457
    %v460 = vpack.c.bf16 %v458, %v458
    %461 = vrot.lane.b32.xlu0 %v120, 48
    %v462 = vpop.permute.xlu0 %461
    %v464 = vsel %vm123, %v459, 0
    %v467 = vsel %vm196, %v462, 0
    %469 = vmatpush.bf16.msra.mxu0 0
    %470 = vmatpush.bf16.msra.mxu0 0
    %471 = vmatpush.bf16.msra.mxu0 0
    %472 = vmatpush.bf16.msra.mxu0 0
    %473 = vmatpush.bf16.msra.mxu0 0
    %474 = vmatpush.bf16.msra.mxu0 0
    %475 = vmatpush.bf16.msra.mxu0 0
    %476 = vmatpush.bf16.msra.mxu0 %v467
    %477 = vmatmul.bf16.gmra.mxu0 %v464
    %v478 = vpop.f32.mrf.mxu0
    %v479 = vadd.f32 0.0, %v478
    %v480 = vpop.f32.mrf.mxu0
    %481 = vdwg.mxu0
    %482 = vrot.lane.b32.xlu0 %v145, 48
    %v483 = vpop.permute.xlu0 %482
    %v485 = vsel %vm123, %v460, 0
    %v488 = vsel %vm196, %v483, 0
    %490 = vmatpush.bf16.msra.mxu0 0
    %491 = vmatpush.bf16.msra.mxu0 0
    %492 = vmatpush.bf16.msra.mxu0 0
    %493 = vmatpush.bf16.msra.mxu0 0
    %494 = vmatpush.bf16.msra.mxu0 0
    %495 = vmatpush.bf16.msra.mxu0 0
    %496 = vmatpush.bf16.msra.mxu0 0
    %497 = vmatpush.bf16.msra.mxu0 %v488
    %498 = vmatmul.bf16.gmra.mxu0 %v485
    %v499 = vpop.f32.mrf.mxu0
    %v500 = vadd.f32 0.0, %v499
    %v501 = vpop.f32.mrf.mxu0
    %502 = vdwg.mxu0
    %v503 = vpack.c.bf16 %v500, %v479
    %s504 = scalar_lea.vmem [#allocation7], 8
    %v505 = vld [vmem:[%s504] sm:$0xf]
    %v507 = vsel %vm123, %v503, 0
    %v510 = vsel %vm196, %v505, 0
    %512 = vmatpush.bf16.msra.mxu0 0
    %513 = vmatpush.bf16.msra.mxu0 0
    %514 = vmatpush.bf16.msra.mxu0 0
    %515 = vmatpush.bf16.msra.mxu0 0
    %516 = vmatpush.bf16.msra.mxu0 0
    %517 = vmatpush.bf16.msra.mxu0 0
    %518 = vmatpush.bf16.msra.mxu0 0
    %519 = vmatpush.bf16.msra.mxu0 %v510
    %520 = vmatmul.bf16.gmra.mxu0 %v507
    %v521 = vpop.f32.mrf.mxu0
    %v522 = vadd.f32 0.0, %v521
    %v523 = vpop.f32.mrf.mxu0
    %v524 = vadd.f32 0.0, %v523
    %525 = vdwg.mxu0
    %v526 = vadd.f32 %v387, %v522
    %v527 = vadd.f32 %v389, %v524
    %528 = vrot.lane.b32.xlu0 %v120, 104
    %v529 = vpop.permute.xlu0 %528
    %530 = vrot.lane.b32.xlu0 %v120, 72
    %v531 = vpop.permute.xlu0 %530
    %v533 = vsel %vm123, %v529, 0
    %v536 = vsel %vm123, %v531, 0
    %538 = vmatpush.bf16.xpose.msra.mxu0 0
    %539 = vmatpush.bf16.xpose.msra.mxu0 0
    %540 = vmatpush.bf16.xpose.msra.mxu0 0
    %541 = vmatpush.bf16.xpose.msra.mxu0 0
    %542 = vmatpush.bf16.xpose.msra.mxu0 0
    %543 = vmatpush.bf16.xpose.msra.mxu0 0
    %544 = vmatpush.bf16.xpose.msra.mxu0 0
    %545 = vmatpush.bf16.xpose.msra.mxu0 %v536
    %546 = vmatmul.bf16.gmra.mxu0 %v533
    %v547 = vpop.f32.mrf.mxu0
    %v548 = vadd.f32 %v117, %v547
    %v549 = vpop.f32.mrf.mxu0
    %550 = vdwg.mxu0
    %551 = vrot.lane.b32.xlu0 %v145, 104
    %v552 = vpop.permute.xlu0 %551
    %553 = vrot.lane.b32.xlu0 %v145, 72
    %v554 = vpop.permute.xlu0 %553
    %v556 = vsel %vm123, %v552, 0
    %v559 = vsel %vm123, %v554, 0
    %561 = vmatpush.bf16.xpose.msra.mxu0 0
    %562 = vmatpush.bf16.xpose.msra.mxu0 0
    %563 = vmatpush.bf16.xpose.msra.mxu0 0
    %564 = vmatpush.bf16.xpose.msra.mxu0 0
    %565 = vmatpush.bf16.xpose.msra.mxu0 0
    %566 = vmatpush.bf16.xpose.msra.mxu0 0
    %567 = vmatpush.bf16.xpose.msra.mxu0 0
    %568 = vmatpush.bf16.xpose.msra.mxu0 %v559
    %569 = vmatmul.bf16.gmra.mxu0 %v556
    %v570 = vpop.f32.mrf.mxu0
    %v571 = vadd.f32 %v117, %v570
    %v572 = vpop.f32.mrf.mxu0
    %573 = vdwg.mxu0
    %v574 = vsel %vm123, %v548, -inf
    %575 = vmax.xlane.f32.xlu0 %v574
    %v576 = vpop.xlane.xlu0 %575
    %v577 = vsel %vm123, %v571, -inf
    %578 = vmax.xlane.f32.xlu0 %v577
    %v579 = vpop.xlane.xlu0 %578
    %v580 = vsub.f32 %v548, %v576
    %v581 = vsub.f32 %v571, %v579
    %v582 = vmul.f32 %v580, 1.442695
    %v583 = vpow.pop %v582
    %v584 = vmul.f32 %v581, 1.442695
    %v585 = vpow.pop %v584
    %v586 = vsel %vm123, %v583, 0.0
    %587 = vadd.xlane.f32.xlu0 %v586
    %v588 = vpop.xlane.xlu0 %587
    %v589 = vsel %vm123, %v585, 0.0
    %590 = vadd.xlane.f32.xlu0 %v589
    %v591 = vpop.xlane.xlu0 %590
    %v592 = vrcp.pop %v588
    %v593 = vrcp.pop %v591
    %v594 = vmul.f32 %v583, %v592
    %v595 = vmul.f32 %v585, %v593
    %v596 = vpack.c.bf16 %v594, %v594
    %v597 = vpack.c.bf16 %v595, %v595
    %598 = vrot.lane.b32.xlu0 %v120, 40
    %v599 = vpop.permute.xlu0 %598
    %v601 = vsel %vm123, %v596, 0
    %v604 = vsel %vm196, %v599, 0
    %606 = vmatpush.bf16.msra.mxu0 0
    %607 = vmatpush.bf16.msra.mxu0 0
    %608 = vmatpush.bf16.msra.mxu0 0
    %609 = vmatpush.bf16.msra.mxu0 0
    %610 = vmatpush.bf16.msra.mxu0 0
    %611 = vmatpush.bf16.msra.mxu0 0
    %612 = vmatpush.bf16.msra.mxu0 0
    %613 = vmatpush.bf16.msra.mxu0 %v604
    %614 = vmatmul.bf16.gmra.mxu0 %v601
    %v615 = vpop.f32.mrf.mxu0
    %v616 = vadd.f32 0.0, %v615
    %v617 = vpop.f32.mrf.mxu0
    %618 = vdwg.mxu0
    %619 = vrot.lane.b32.xlu0 %v145, 40
    %v620 = vpop.permute.xlu0 %619
    %v622 = vsel %vm123, %v597, 0
    %v625 = vsel %vm196, %v620, 0
    %627 = vmatpush.bf16.msra.mxu0 0
    %628 = vmatpush.bf16.msra.mxu0 0
    %629 = vmatpush.bf16.msra.mxu0 0
    %630 = vmatpush.bf16.msra.mxu0 0
    %631 = vmatpush.bf16.msra.mxu0 0
    %632 = vmatpush.bf16.msra.mxu0 0
    %633 = vmatpush.bf16.msra.mxu0 0
    %634 = vmatpush.bf16.msra.mxu0 %v625
    %635 = vmatmul.bf16.gmra.mxu0 %v622
    %v636 = vpop.f32.mrf.mxu0
    %v637 = vadd.f32 0.0, %v636
    %v638 = vpop.f32.mrf.mxu0
    %639 = vdwg.mxu0
    %v640 = vpack.c.bf16 %v637, %v616
    %s641 = scalar_lea.vmem [#allocation7], 12
    %v642 = vld [vmem:[%s641] sm:$0xf]
    %v644 = vsel %vm123, %v640, 0
    %v647 = vsel %vm196, %v642, 0
    %649 = vmatpush.bf16.msra.mxu0 0
    %650 = vmatpush.bf16.msra.mxu0 0
    %651 = vmatpush.bf16.msra.mxu0 0
    %652 = vmatpush.bf16.msra.mxu0 0
    %653 = vmatpush.bf16.msra.mxu0 0
    %654 = vmatpush.bf16.msra.mxu0 0
    %655 = vmatpush.bf16.msra.mxu0 0
    %656 = vmatpush.bf16.msra.mxu0 %v647
    %657 = vmatmul.bf16.gmra.mxu0 %v644
    %v658 = vpop.f32.mrf.mxu0
    %v659 = vadd.f32 0.0, %v658
    %v660 = vpop.f32.mrf.mxu0
    %v661 = vadd.f32 0.0, %v660
    %662 = vdwg.mxu0
    %v663 = vadd.f32 %v526, %v659
    %v664 = vadd.f32 %v527, %v661
    %v665 = vld [vmem:[%s4] sm:$0x1]
    %v667 = vperm.slane %v665, 0
    %v669 = vadd.f32 %v663, %v667
    %v670 = vadd.f32 %v664, %v667
    %671 = vst.msk [vmem:[#allocation8] sm:$0xff] %vm92, %v669
    %672 = vst.msk [vmem:[#allocation8 + $0x8] sm:$0xff] %vm92, %v670
    // Predicated region
    $region34: #{tpu_custom_call.1} parent=1 // pred_check
      _
    $region35: #{tpu_custom_call.1} parent=1 // pred_check_branch
      %674 = sbr.rel (0) target = $region37
    $region36: #{tpu_custom_call.1} parent=1 // pred_region
      %676 = vsyncadd [#allocation4], 0
      %s677 = sshll.u32 [#allocation8], 4
      %s678 = int_to_ptr.vmem [resolvable:$true] %s677
      %s679 = sshll.u32 %s5, 4
      %s680 = int_to_ptr.hbm [resolvable:$true] %s679
      %685 = dma.vmem_to_hbm [thread:$0]  %s678, 256, %s680, [#allocation4], 128, 128, 8
    $region37: #{tpu_custom_call.1} parent=1 // pred_fallthru
      _
    // Predicated region
    $region38: #{tpu_custom_call.1} parent=1 // pred_check
      _
    $region39: #{tpu_custom_call.1} parent=1 // pred_check_branch
      %687 = sbr.rel (0) target = $region41
    $region40: #{tpu_custom_call.1} parent=1 // pred_region
      %689 = dma.done [#allocation4], 256
    $region41: #{tpu_custom_call.1} parent=1 // pred_fallthru
      _
    %690 = vsyncpa [#allocation3], 1
    %691 = vsyncpa [#allocation6], 1
    %692 = vsyncpa [#allocation4], 1

</llo_original>
